<compile_context>
chip_gen: v5e
topology: v5e:2x2
jax: 0.10.0
libtpu: 0.0.40
codegen_flags: <defaults>
</compile_context>

<pallas_src>
import jax
import jax.numpy as jnp
from jax.experimental import pallas as pl
from jax.experimental.pallas import tpu as pltpu


def dnn_kernel(x_ref, w1_ref, b1_ref, w2_ref, b2_ref, w3_ref, b3_ref, o_ref):
    # In-kernel cast of the x tile to the weight dtype (no-op when both are f32;
    # a cheap VPU op when the weights are bf16 -> layer-1 runs at bf16 MXU rate
    # without adding a wrapper-side HBM pass over x).
    x = x_ref[...].astype(w1_ref.dtype)
    # Layer 1: (tb,600) @ (600,128) + (1,128) -> ReLU   (f32 accumulation on the MXU)
    h = jnp.dot(x, w1_ref[...], preferred_element_type=jnp.float32)
    h = jnp.maximum(h + b1_ref[...], 0.0)
    # Layer 2: (tb,128) @ (128,64) + (1,64) -> ReLU
    h = jnp.dot(h.astype(w2_ref.dtype), w2_ref[...],
                preferred_element_type=jnp.float32)
    h = jnp.maximum(h + b2_ref[...], 0.0)
    # Layer 3: (tb,64) @ (64,8) + (1,8) -> ReLU
    h = jnp.dot(h.astype(w3_ref.dtype), w3_ref[...],
                preferred_element_type=jnp.float32)
    h = jnp.maximum(h + b3_ref[...], 0.0)
    # NOTE: forward() never applies self.output (8 -> 1); return post-ReLU hidden2.
    o_ref[...] = h.astype(o_ref.dtype)


def _round_up(n, m):
    return ((n + m - 1) // m) * m


def _pick_tile(B, tb_max):
    """Choose the batch tile (rows per grid step).

    - never larger than tb_max (VMEM budget),
    - >= 2 grid steps when there's enough work, and an even step count, so both
      v7x TensorCores receive balanced shards of the only parallel axis,
    - multiple of 8 (sublane alignment); the last block may be partial (ragged grid).
    """
    steps = pl.cdiv(B, tb_max)
    if steps == 1 and B > 8:
        steps = 2
    elif steps > 1 and steps % 2 == 1:
        steps += 1
    return _round_up(pl.cdiv(B, steps), 8)


def dnn_forward(x, params, *, tb=None, compute_dtype=jnp.float32):
    """x: (B, ...) with 600 features after flattening.  Returns (B, 8) float32.

    tb: max rows per grid step.  Default: 2048 for f32 x, 4096 for bf16 x —
        amortizes the ~0.35 us/step overhead while the double-buffered x tile
        stays ~10.5 MiB.
    compute_dtype: f32 (exact) or bf16 (weights cast once at the boundary; the x
        tile is cast inside the kernel; f32 accumulation kept).
    """
    w1, b1, w2, b2, w3, b3 = params
    B = x.shape[0]
    x = x.reshape(B, -1)                      # mirrors x.view(x.size(0), -1)
    assert x.shape[1] == 600, f"expected 600 features, got {x.shape[1]}"

    if compute_dtype != jnp.float32:
        # Weights are tiny (~342 KB): cast once.  x is deliberately NOT cast here —
        # that would be a separate XLA op reading f32 x and writing a bf16 copy
        # (1.5x extra HBM traffic).  The kernel casts the x tile in VMEM instead.
        w1 = w1.astype(compute_dtype)
        w2 = w2.astype(compute_dtype)
        w3 = w3.astype(compute_dtype)
        # biases stay f32: added to the f32 MXU accumulator.

    x_itemsize = jnp.dtype(x.dtype).itemsize
    w_itemsize = jnp.dtype(w1.dtype).itemsize
    if tb is None:
        tb = 4096 if x_itemsize <= 2 else 2048

    tb_eff = _pick_tile(B, tb)
    grid = (pl.cdiv(B, tb_eff),)              # ragged: last block may be partial

    # VMEM budget (lane-padded): double-buffered x tile + double-buffered output
    # tile + h1/h2 f32 intermediates + resident weights.  Floor at the 32 MiB
    # default so we never shrink the compiler's budget; cap at 48 MiB (< v7x's
    # 64 MiB physical VMEM).
    vmem_est = (2 * tb_eff * 640 * x_itemsize          # x tile (600 -> 640 lanes)
                + 2 * tb_eff * 128 * 4                 # out tile (8 -> 128 lanes)
                + 2 * tb_eff * 128 * 4                 # h1 / h2 intermediates
                + 2 * (600 * 128 + 128 * 128 + 64 * 128 + 3 * 128) * w_itemsize)
    vmem_limit = min(48 << 20, max(32 << 20, int(1.5 * vmem_est)))

    cost = pl.CostEstimate(
        flops=2 * B * (600 * 128 + 128 * 64 + 64 * 8),
        transcendentals=0,
        bytes_accessed=(B * 600 * x_itemsize + B * 8 * 4
                        + (600 * 128 + 128 + 128 * 64 + 64 + 64 * 8 + 8) * w_itemsize),
    )

    out = pl.pallas_call(
        dnn_kernel,
        out_shape=jax.ShapeDtypeStruct((B, 8), jnp.float32),
        grid_spec=pltpu.PrefetchScalarGridSpec(
            num_scalar_prefetch=0,
            grid=grid,
            in_specs=[
                pl.BlockSpec((tb_eff, 600), lambda i: (i, 0)),  # x tile (streamed)
                pl.BlockSpec((600, 128), lambda i: (0, 0)),     # W1 (VMEM-resident)
                pl.BlockSpec((1, 128), lambda i: (0, 0)),       # b1
                pl.BlockSpec((128, 64), lambda i: (0, 0)),      # W2
                pl.BlockSpec((1, 64), lambda i: (0, 0)),        # b2
                pl.BlockSpec((64, 8), lambda i: (0, 0)),        # W3
                pl.BlockSpec((1, 8), lambda i: (0, 0)),         # b3
            ],
            out_specs=pl.BlockSpec((tb_eff, 8), lambda i: (i, 0)),
        ),
        compiler_params=pltpu.CompilerParams(
            # batch axis is independent -> shardable across v7x's 2 TensorCores.
            dimension_semantics=("parallel",),
            vmem_limit_bytes=vmem_limit,
        ),
        cost_estimate=cost,
    )(x, w1, b1, w2, b2, w3, b3)

    return out


def init_params(key):
    """Deterministic init mimicking nn.Linear default (uniform +/- 1/sqrt(fan_in)).
    Weights are stored as (in_features, out_features)."""
    dims = [(600, 128), (128, 64), (64, 8)]
    params = []
    for (fan_in, fan_out) in dims:
        key, kw, kb = jax.random.split(key, 3)
        bound = 1.0 / jnp.sqrt(fan_in)
        w = jax.random.uniform(kw, (fan_in, fan_out), jnp.float32, -bound, bound)
        b = jax.random.uniform(kb, (1, fan_out), jnp.float32, -bound, bound)
        params += [w, b]
    # TODO(synk): self.output (Linear 8->1) exists in __init__ but is unused in
    # forward(); it is intentionally not instantiated here.
    return tuple(params)


def reference_forward(x, params):
    w1, b1, w2, b2, w3, b3 = params
    x = x.reshape(x.shape[0], -1)
    h = jnp.maximum(x @ w1 + b1, 0.0)
    h = jnp.maximum(h @ w2 + b2, 0.0)
    h = jnp.maximum(h @ w3 + b3, 0.0)
    return h


if __name__ == "__main__":
    key = jax.random.PRNGKey(0)
    k_x, k_x2, k_p = jax.random.split(key, 3)
    params = init_params(k_p)

    # --- small exact f32 check (forces a 2-step grid via the tile picker) ---
    B = 16
    x = jax.random.normal(k_x, (B, 600), jnp.float32)
    out = jax.block_until_ready(dnn_forward(x, params))
    ref = reference_forward(x, params)
    assert out.shape == (B, 8)
    assert jnp.allclose(out, ref, atol=1e-5, rtol=1e-5), "f32 mismatch vs reference"

    # --- ragged, multi-step grid: non-multiple batch, partial last block, no pad ---
    B2 = 300
    x2 = jax.random.normal(k_x2, (B2, 600), jnp.float32)
    out2 = jax.block_until_ready(dnn_forward(x2, params, tb=128))
    ref2 = reference_forward(x2, params)
    assert out2.shape == (B2, 8)
    assert jnp.allclose(out2, ref2, atol=1e-5, rtol=1e-5), "ragged-grid mismatch"

    # --- bf16-weight compute path: x stays f32 in HBM, cast in-kernel; f32 accum ---
    out_bf16 = jax.block_until_ready(
        dnn_forward(x2, params, tb=128, compute_dtype=jnp.bfloat16))
    assert out_bf16.shape == (B2, 8)
    assert jnp.allclose(out_bf16, ref2, atol=5e-2, rtol=5e-2), "bf16 mismatch"

    print("KERNEL_OK")
</pallas_src>

<mosaic_0001>
module attributes {stable_mosaic.version = 11 : i64} {
  func.func @dnn_kernel(%arg0: i32, %arg1: memref<8x600xf32, #tpu.memory_space<vmem>>, %arg2: memref<600x128xf32, #tpu.memory_space<vmem>>, %arg3: memref<1x128xf32, #tpu.memory_space<vmem>>, %arg4: memref<128x64xf32, #tpu.memory_space<vmem>>, %arg5: memref<1x64xf32, #tpu.memory_space<vmem>>, %arg6: memref<64x8xf32, #tpu.memory_space<vmem>>, %arg7: memref<1x8xf32, #tpu.memory_space<vmem>>, %arg8: memref<8x8xf32, #tpu.memory_space<vmem>>) attributes {dimension_semantics = [#tpu.dimension_semantics<parallel>], iteration_bounds = array<i64: 2>, scalar_prefetch = 0 : i64, scratch_operands = 0 : i64, tpu.core_type = #tpu.core_type<tc>, window_params = [{transform_indices = @transform_0, window_bounds = array<i64: 8, 600>}, {pipeline_mode = #tpu.pipeline_mode<synchronous>, transform_indices = @transform_1, window_bounds = array<i64: 600, 128>}, {pipeline_mode = #tpu.pipeline_mode<synchronous>, transform_indices = @transform_2, window_bounds = array<i64: 1, 128>}, {pipeline_mode = #tpu.pipeline_mode<synchronous>, transform_indices = @transform_3, window_bounds = array<i64: 128, 64>}, {pipeline_mode = #tpu.pipeline_mode<synchronous>, transform_indices = @transform_4, window_bounds = array<i64: 1, 64>}, {pipeline_mode = #tpu.pipeline_mode<synchronous>, transform_indices = @transform_5, window_bounds = array<i64: 64, 8>}, {pipeline_mode = #tpu.pipeline_mode<synchronous>, transform_indices = @transform_6, window_bounds = array<i64: 1, 8>}, {transform_indices = @transform_7, window_bounds = array<i64: 8, 8>}]} {
    %c0 = arith.constant 0 : index
    %c0_0 = arith.constant 0 : index
    %0 = vector.load %arg1[%c0, %c0_0] : memref<8x600xf32, #tpu.memory_space<vmem>>, vector<8x600xf32>
    %c0_1 = arith.constant 0 : index
    %c0_2 = arith.constant 0 : index
    %1 = vector.load %arg2[%c0_1, %c0_2] : memref<600x128xf32, #tpu.memory_space<vmem>>, vector<600x128xf32>
    %cst = arith.constant dense<0.000000e+00> : vector<8x128xf32>
    %2 = tpu.matmul %0, %1, %cst {dimension_numbers = #tpu.dot_dimension_numbers<[1], [0], [0], [1], [0, 0, 1, 1], [], []>} : vector<8x600xf32>, vector<600x128xf32>, vector<8x128xf32> -> vector<8x128xf32>
    %c0_3 = arith.constant 0 : index
    %c0_4 = arith.constant 0 : index
    %3 = vector.load %arg3[%c0_3, %c0_4] : memref<1x128xf32, #tpu.memory_space<vmem>>, vector<1x128xf32>
    %4 = vector.broadcast %3 : vector<1x128xf32> to vector<8x128xf32>
    %5 = arith.addf %2, %4 : vector<8x128xf32>
    %cst_5 = arith.constant 0.000000e+00 : f32
    %6 = vector.broadcast %cst_5 : f32 to vector<8x128xf32>
    %7 = arith.maximumf %5, %6 : vector<8x128xf32>
    %c0_6 = arith.constant 0 : index
    %c0_7 = arith.constant 0 : index
    %8 = vector.load %arg4[%c0_6, %c0_7] : memref<128x64xf32, #tpu.memory_space<vmem>>, vector<128x64xf32>
    %cst_8 = arith.constant dense<0.000000e+00> : vector<8x64xf32>
    %9 = tpu.matmul %7, %8, %cst_8 {dimension_numbers = #tpu.dot_dimension_numbers<[1], [0], [0], [1], [0, 0, 1, 1], [], []>} : vector<8x128xf32>, vector<128x64xf32>, vector<8x64xf32> -> vector<8x64xf32>
    %c0_9 = arith.constant 0 : index
    %c0_10 = arith.constant 0 : index
    %10 = vector.load %arg5[%c0_9, %c0_10] : memref<1x64xf32, #tpu.memory_space<vmem>>, vector<1x64xf32>
    %11 = vector.broadcast %10 : vector<1x64xf32> to vector<8x64xf32>
    %12 = arith.addf %9, %11 : vector<8x64xf32>
    %cst_11 = arith.constant 0.000000e+00 : f32
    %13 = vector.broadcast %cst_11 : f32 to vector<8x64xf32>
    %14 = arith.maximumf %12, %13 : vector<8x64xf32>
    %c0_12 = arith.constant 0 : index
    %c0_13 = arith.constant 0 : index
    %15 = vector.load %arg6[%c0_12, %c0_13] : memref<64x8xf32, #tpu.memory_space<vmem>>, vector<64x8xf32>
    %cst_14 = arith.constant dense<0.000000e+00> : vector<8x8xf32>
    %16 = tpu.matmul %14, %15, %cst_14 {dimension_numbers = #tpu.dot_dimension_numbers<[1], [0], [0], [1], [0, 0, 1, 1], [], []>} : vector<8x64xf32>, vector<64x8xf32>, vector<8x8xf32> -> vector<8x8xf32>
    %c0_15 = arith.constant 0 : index
    %c0_16 = arith.constant 0 : index
    %17 = vector.load %arg7[%c0_15, %c0_16] : memref<1x8xf32, #tpu.memory_space<vmem>>, vector<1x8xf32>
    %18 = vector.broadcast %17 : vector<1x8xf32> to vector<8x8xf32>
    %19 = arith.addf %16, %18 : vector<8x8xf32>
    %cst_17 = arith.constant 0.000000e+00 : f32
    %20 = vector.broadcast %cst_17 : f32 to vector<8x8xf32>
    %21 = arith.maximumf %19, %20 : vector<8x8xf32>
    %c0_18 = arith.constant 0 : index
    %c0_19 = arith.constant 0 : index
    %22 = vector.load %arg8[%c0_18, %c0_19] : memref<8x8xf32, #tpu.memory_space<vmem>>, vector<8x8xf32>
    tpu.vector_store %arg8[%c0_18, %c0_19], %21 {strides = array<i32>} : memref<8x8xf32, #tpu.memory_space<vmem>>, vector<8x8xf32>,
    return
  }
  func.func @transform_0(%arg0: i32) -> (i32, i32) {
    %c0_i32 = arith.constant 0 : i32
    %c0_i32_0 = arith.constant 0 : i32
    return %arg0, %c0_i32 : i32, i32
  }
  func.func @transform_1(%arg0: i32) -> (i32, i32) {
    %c0_i32 = arith.constant 0 : i32
    %c0_i32_0 = arith.constant 0 : i32
    %c0_i32_1 = arith.constant 0 : i32
    return %c0_i32, %c0_i32_0 : i32, i32
  }
  func.func @transform_2(%arg0: i32) -> (i32, i32) {
    %c0_i32 = arith.constant 0 : i32
    %c0_i32_0 = arith.constant 0 : i32
    %c0_i32_1 = arith.constant 0 : i32
    return %c0_i32, %c0_i32_0 : i32, i32
  }
  func.func @transform_3(%arg0: i32) -> (i32, i32) {
    %c0_i32 = arith.constant 0 : i32
    %c0_i32_0 = arith.constant 0 : i32
    %c0_i32_1 = arith.constant 0 : i32
    return %c0_i32, %c0_i32_0 : i32, i32
  }
  func.func @transform_4(%arg0: i32) -> (i32, i32) {
    %c0_i32 = arith.constant 0 : i32
    %c0_i32_0 = arith.constant 0 : i32
    %c0_i32_1 = arith.constant 0 : i32
    return %c0_i32, %c0_i32_0 : i32, i32
  }
  func.func @transform_5(%arg0: i32) -> (i32, i32) {
    %c0_i32 = arith.constant 0 : i32
    %c0_i32_0 = arith.constant 0 : i32
    %c0_i32_1 = arith.constant 0 : i32
    return %c0_i32, %c0_i32_0 : i32, i32
  }
  func.func @transform_6(%arg0: i32) -> (i32, i32) {
    %c0_i32 = arith.constant 0 : i32
    %c0_i32_0 = arith.constant 0 : i32
    %c0_i32_1 = arith.constant 0 : i32
    return %c0_i32, %c0_i32_0 : i32, i32
  }
  func.func @transform_7(%arg0: i32) -> (i32, i32) {
    %c0_i32 = arith.constant 0 : i32
    %c0_i32_0 = arith.constant 0 : i32
    return %arg0, %c0_i32 : i32, i32
  }
}

</mosaic_0001>

<llo_original>
// kernel: tpu_custom_call.1
$region0: #{tpu_custom_call.1}
  #allocation0 [shape = 'u32[]', space=smem, size = 0x4, offset = 0x4, fixed_abs, tag = 'smem constant byte address 0x4 - core index']
  #allocation1 [shape = 'u32[72,128]{1,0:T(1,128)}', space=vmem, size = 0x9000, scoped, tag = 'internal scratch']
  %s0 = inlined_call_operand.vmem [shape: f32[16,600], index: 0, kind: input, shape index: {}]
  %s1 = inlined_call_operand.hbm [shape: f32[600,128], index: 1, kind: input, shape index: {}]
  %s2 = inlined_call_operand.vmem [shape: f32[1,128], index: 2, kind: input, shape index: {}]
  %s3 = inlined_call_operand.vmem [shape: f32[128,64], index: 3, kind: input, shape index: {}]
  %s4 = inlined_call_operand.vmem [shape: f32[1,64], index: 4, kind: input, shape index: {}]
  %s5 = inlined_call_operand.vmem [shape: f32[64,8], index: 5, kind: input, shape index: {}]
  %s6 = inlined_call_operand.vmem [shape: f32[1,8], index: 6, kind: input, shape index: {}]
  %s7 = inlined_call_operand.vmem [shape: f32[16,8], index: 7, kind: output, shape index: {}]
  %s8 = sld [smem:[#allocation0]]
  $region65: #{tpu_custom_call.1} parent=0
    _
  %s10 = ssub.s32 1, %s8
  %s11 = scalar_select 0, %s10, %s8
  $region1: #{tpu_custom_call.1} parent=0
    #allocation2 [shape = 'u8[307200]{0}', space=vmem, size = 0x4b000, scoped, tag = 'input window, operand 1, single buffered']
    #allocation3 [shape = 's32[2]{0}', space=sflag, size = 0x8, scoped, tag = 'scoped memory for tpu_custom_call.1']
    %12 = vsyncpa [#allocation3], 0
    loop: start=0, step=1, limit=4
    $region2: #{tpu_custom_call.1} parent=1 // loop_pre_header
      _
    $region3: #{tpu_custom_call.1} parent=1 // loop_header
      %s14 = sphi 0, %s18
      %p15 = scmp.ge.s32.totalorder %s14, 4
      %s24 = sphi 0, %s26
      %s27 = sphi 0, %s24
      %s28 = sphi 0, %s27
      %s44 = sphi 0, %s28
      %s48 = sphi 0, %s48
      %s50 = sphi 0, %s48
      %s51 = sphi 0, %s50
      %s65 = sphi 0, %s51
      %s69 = sphi 0, %s69
      %s71 = sphi 0, %s69
      %s72 = sphi 0, %s71
      %s86 = sphi 0, %s72
      %s90 = sphi 0, %s90
      %s92 = sphi 0, %s90
      %s93 = sphi 0, %s92
      %s107 = sphi 0, %s93
      %s111 = sphi 0, %s111
      %s113 = sphi 0, %s111
      %s114 = sphi 0, %s113
      %s128 = sphi 0, %s114
      %s132 = sphi 0, %s132
      %s134 = sphi 0, %s132
      %s135 = sphi 0, %s134
      %s149 = sphi 0, %s135
      %s153 = sphi 0, %s153
      %s155 = sphi 0, %s153
      %s156 = sphi 0, %s155
      %s170 = sphi 0, %s156
      %s176 = sphi 0, %s178
      %s179 = sphi 0, %s176
      %s180 = sphi 0, %s179
      %s196 = sphi 0, %s180
    $region4: #{tpu_custom_call.1} parent=1 // loop_header_branch
      %17 = sbr.rel (%p15) target = $region8
    $region5: #{tpu_custom_call.1} parent=1 // loop_body
      %s19 = ssub.s32 %s14, 1
      %s20 = ssub.s32 %s14, 2
      %s21 = sadd.s32 %s14, 1
      %s22 = ssub.s32 %s14, %s21
      %p23 = scmp.eq.s32.totalorder %s22, 0
      %s25 = sadd.s32 %s24, 1
      %s26 = scalar_select %p23, %s24, %s25
      %p29 = pneg %p23
      %p30 = scmp.eq.s32.totalorder %s14, 1
      %p31 = por %p29, %p30
      %p32 = scmp.ne.s32.totalorder %s24, %s27
      %p33 = scmp.eq.s32.totalorder %s14, 0
      %p34 = por %p32, %p33
      %p35 = scmp.ne.s32.totalorder %s24, %s27
      %p36 = scmp.eq.s32.totalorder %s19, 1
      %p37 = por %p35, %p36
      %p38 = scmp.ne.s32.totalorder %s27, %s28
      %p39 = scmp.eq.s32.totalorder %s19, 0
      %p40 = por %p38, %p39
      %p41 = scmp.ne.s32.totalorder %s27, %s28
      %p42 = scmp.eq.s32.totalorder %s20, 1
      %p43 = por %p41, %p42
      %p45 = scmp.ne.s32.totalorder %s28, %s44
      %p46 = scmp.eq.s32.totalorder %s20, 0
      %p47 = por %p45, %p46
      %s49 = sadd.s32 %s48, 1
      %p52 = scmp.eq.s32.totalorder %s14, 1
      %p53 = scmp.ne.s32.totalorder %s48, %s50
      %p54 = scmp.eq.s32.totalorder %s14, 0
      %p55 = por %p53, %p54
      %p56 = scmp.ne.s32.totalorder %s48, %s50
      %p57 = scmp.eq.s32.totalorder %s19, 1
      %p58 = por %p56, %p57
      %p59 = scmp.ne.s32.totalorder %s50, %s51
      %p60 = scmp.eq.s32.totalorder %s19, 0
      %p61 = por %p59, %p60
      %p62 = scmp.ne.s32.totalorder %s50, %s51
      %p63 = scmp.eq.s32.totalorder %s20, 1
      %p64 = por %p62, %p63
      %p66 = scmp.ne.s32.totalorder %s51, %s65
      %p67 = scmp.eq.s32.totalorder %s20, 0
      %p68 = por %p66, %p67
      %s70 = sadd.s32 %s69, 1
      %p73 = scmp.eq.s32.totalorder %s14, 1
      %p74 = scmp.ne.s32.totalorder %s69, %s71
      %p75 = scmp.eq.s32.totalorder %s14, 0
      %p76 = por %p74, %p75
      %p77 = scmp.ne.s32.totalorder %s69, %s71
      %p78 = scmp.eq.s32.totalorder %s19, 1
      %p79 = por %p77, %p78
      %p80 = scmp.ne.s32.totalorder %s71, %s72
      %p81 = scmp.eq.s32.totalorder %s19, 0
      %p82 = por %p80, %p81
      %p83 = scmp.ne.s32.totalorder %s71, %s72
      %p84 = scmp.eq.s32.totalorder %s20, 1
      %p85 = por %p83, %p84
      %p87 = scmp.ne.s32.totalorder %s72, %s86
      %p88 = scmp.eq.s32.totalorder %s20, 0
      %p89 = por %p87, %p88
      %s91 = sadd.s32 %s90, 1
      %p94 = scmp.eq.s32.totalorder %s14, 1
      %p95 = scmp.ne.s32.totalorder %s90, %s92
      %p96 = scmp.eq.s32.totalorder %s14, 0
      %p97 = por %p95, %p96
      %p98 = scmp.ne.s32.totalorder %s90, %s92
      %p99 = scmp.eq.s32.totalorder %s19, 1
      %p100 = por %p98, %p99
      %p101 = scmp.ne.s32.totalorder %s92, %s93
      %p102 = scmp.eq.s32.totalorder %s19, 0
      %p103 = por %p101, %p102
      %p104 = scmp.ne.s32.totalorder %s92, %s93
      %p105 = scmp.eq.s32.totalorder %s20, 1
      %p106 = por %p104, %p105
      %p108 = scmp.ne.s32.totalorder %s93, %s107
      %p109 = scmp.eq.s32.totalorder %s20, 0
      %p110 = por %p108, %p109
      %s112 = sadd.s32 %s111, 1
      %p115 = scmp.eq.s32.totalorder %s14, 1
      %p116 = scmp.ne.s32.totalorder %s111, %s113
      %p117 = scmp.eq.s32.totalorder %s14, 0
      %p118 = por %p116, %p117
      %p119 = scmp.ne.s32.totalorder %s111, %s113
      %p120 = scmp.eq.s32.totalorder %s19, 1
      %p121 = por %p119, %p120
      %p122 = scmp.ne.s32.totalorder %s113, %s114
      %p123 = scmp.eq.s32.totalorder %s19, 0
      %p124 = por %p122, %p123
      %p125 = scmp.ne.s32.totalorder %s113, %s114
      %p126 = scmp.eq.s32.totalorder %s20, 1
      %p127 = por %p125, %p126
      %p129 = scmp.ne.s32.totalorder %s114, %s128
      %p130 = scmp.eq.s32.totalorder %s20, 0
      %p131 = por %p129, %p130
      %s133 = sadd.s32 %s132, 1
      %p136 = scmp.eq.s32.totalorder %s14, 1
      %p137 = scmp.ne.s32.totalorder %s132, %s134
      %p138 = scmp.eq.s32.totalorder %s14, 0
      %p139 = por %p137, %p138
      %p140 = scmp.ne.s32.totalorder %s132, %s134
      %p141 = scmp.eq.s32.totalorder %s19, 1
      %p142 = por %p140, %p141
      %p143 = scmp.ne.s32.totalorder %s134, %s135
      %p144 = scmp.eq.s32.totalorder %s19, 0
      %p145 = por %p143, %p144
      %p146 = scmp.ne.s32.totalorder %s134, %s135
      %p147 = scmp.eq.s32.totalorder %s20, 1
      %p148 = por %p146, %p147
      %p150 = scmp.ne.s32.totalorder %s135, %s149
      %p151 = scmp.eq.s32.totalorder %s20, 0
      %p152 = por %p150, %p151
      %s154 = sadd.s32 %s153, 1
      %p157 = scmp.eq.s32.totalorder %s14, 1
      %p158 = scmp.ne.s32.totalorder %s153, %s155
      %p159 = scmp.eq.s32.totalorder %s14, 0
      %p160 = por %p158, %p159
      %p161 = scmp.ne.s32.totalorder %s153, %s155
      %p162 = scmp.eq.s32.totalorder %s19, 1
      %p163 = por %p161, %p162
      %p164 = scmp.ne.s32.totalorder %s155, %s156
      %p165 = scmp.eq.s32.totalorder %s19, 0
      %p166 = por %p164, %p165
      %p167 = scmp.ne.s32.totalorder %s155, %s156
      %p168 = scmp.eq.s32.totalorder %s20, 1
      %p169 = por %p167, %p168
      %p171 = scmp.ne.s32.totalorder %s156, %s170
      %p172 = scmp.eq.s32.totalorder %s20, 0
      %p173 = por %p171, %p172
      %s174 = ssub.s32 %s14, %s21
      %p175 = scmp.eq.s32.totalorder %s174, 0
      %s177 = sadd.s32 %s176, 1
      %s178 = scalar_select %p175, %s176, %s177
      %p181 = pneg %p175
      %p182 = scmp.eq.s32.totalorder %s14, 1
      %p183 = por %p181, %p182
      %p184 = scmp.ne.s32.totalorder %s176, %s179
      %p185 = scmp.eq.s32.totalorder %s14, 0
      %p186 = por %p184, %p185
      %p187 = scmp.ne.s32.totalorder %s176, %s179
      %p188 = scmp.eq.s32.totalorder %s19, 1
      %p189 = por %p187, %p188
      %p190 = scmp.ne.s32.totalorder %s179, %s180
      %p191 = scmp.eq.s32.totalorder %s19, 0
      %p192 = por %p190, %p191
      %p193 = scmp.ne.s32.totalorder %s179, %s180
      %p194 = scmp.eq.s32.totalorder %s20, 1
      %p195 = por %p193, %p194
      %p197 = scmp.ne.s32.totalorder %s180, %s196
      %p198 = scmp.eq.s32.totalorder %s20, 0
      %p199 = por %p197, %p198
      %p200 = scmp.le.s32.totalorder 1, %s14
      %p201 = scmp.lt.s32.totalorder %s14, 3
      %p202 = pnand %p200, %p201
      %p203 = pneg %p202
      // Predicated region
      $region9: #{tpu_custom_call.1} parent=5 // pred_check
        _
      $region10: #{tpu_custom_call.1} parent=5 // pred_check_branch
        %205 = sbr.rel (%p202) target = $region12
      $region11: #{tpu_custom_call.1} parent=5 // pred_region
        %s206 = ssub.s32 %s14, 1
        // Predicated region
        $region13: #{tpu_custom_call.1} parent=11 // pred_check
          %p207 = pneg %p61
        $region14: #{tpu_custom_call.1} parent=11 // pred_check_branch
          %209 = sbr.rel (%p207) target = $region16
        $region15: #{tpu_custom_call.1} parent=11 // pred_region
          %211 = vsyncadd [#allocation3], 0
          %s212 = sshll.u32 %s1, 4
          %s213 = int_to_ptr.hbm [resolvable:$true] %s212
          %s214 = sshll.u32 [#allocation2], 4
          %s215 = int_to_ptr.vmem [resolvable:$true] %s214
          %220 = dma.hbm_to_vmem [thread:$0]  %s213, 9600, %s215, [#allocation3], 128, 128, 8
        $region16: #{tpu_custom_call.1} parent=11 // pred_fallthru
          _
        // Predicated region
        $region17: #{tpu_custom_call.1} parent=11 // pred_check
          %p221 = pneg %p82
        $region18: #{tpu_custom_call.1} parent=11 // pred_check_branch
          %223 = sbr.rel (%p221) target = $region20
        $region19: #{tpu_custom_call.1} parent=11 // pred_region
          _
        $region20: #{tpu_custom_call.1} parent=11 // pred_fallthru
          _
        // Predicated region
        $region21: #{tpu_custom_call.1} parent=11 // pred_check
          %p224 = pneg %p103
        $region22: #{tpu_custom_call.1} parent=11 // pred_check_branch
          %226 = sbr.rel (%p224) target = $region24
        $region23: #{tpu_custom_call.1} parent=11 // pred_region
          _
        $region24: #{tpu_custom_call.1} parent=11 // pred_fallthru
          _
        // Predicated region
        $region25: #{tpu_custom_call.1} parent=11 // pred_check
          %p227 = pneg %p124
        $region26: #{tpu_custom_call.1} parent=11 // pred_check_branch
          %229 = sbr.rel (%p227) target = $region28
        $region27: #{tpu_custom_call.1} parent=11 // pred_region
          _
        $region28: #{tpu_custom_call.1} parent=11 // pred_fallthru
          _
        // Predicated region
        $region29: #{tpu_custom_call.1} parent=11 // pred_check
          %p230 = pneg %p145
        $region30: #{tpu_custom_call.1} parent=11 // pred_check_branch
          %232 = sbr.rel (%p230) target = $region32
        $region31: #{tpu_custom_call.1} parent=11 // pred_region
          _
        $region32: #{tpu_custom_call.1} parent=11 // pred_fallthru
          _
        // Predicated region
        $region33: #{tpu_custom_call.1} parent=11 // pred_check
          %p233 = pneg %p166
        $region34: #{tpu_custom_call.1} parent=11 // pred_check_branch
          %235 = sbr.rel (%p233) target = $region36
        $region35: #{tpu_custom_call.1} parent=11 // pred_region
          _
        $region36: #{tpu_custom_call.1} parent=11 // pred_fallthru
          _
      $region12: #{tpu_custom_call.1} parent=5 // pred_fallthru
        _
      %p236 = scmp.lt.s32.totalorder %s14, 2
      // Predicated region
      $region37: #{tpu_custom_call.1} parent=5 // pred_check
        %p237 = pneg %p236
      $region38: #{tpu_custom_call.1} parent=5 // pred_check_branch
        %239 = sbr.rel (%p237) target = $region40
      $region39: #{tpu_custom_call.1} parent=5 // pred_region
        // Predicated region
        $region41: #{tpu_custom_call.1} parent=39 // pred_check
          %p240 = pneg %p34
        $region42: #{tpu_custom_call.1} parent=39 // pred_check_branch
          %242 = sbr.rel (%p240) target = $region44
        $region43: #{tpu_custom_call.1} parent=39 // pred_region
          %p243 = scmp.lt.s32.totalorder %s14, 1
          %s244 = scalar_select %p243, %s14, 1
          %s245 = smul.addr %s244, 5
          %s246 = smul.addr %s245, 8
          %s247 = scalar_lea.vmem %s0, %s246
        $region44: #{tpu_custom_call.1} parent=39 // pred_fallthru
          _
      $region40: #{tpu_custom_call.1} parent=5 // pred_fallthru
        _
      %p248 = scmp.le.s32.totalorder 1, %s14
      %p249 = scmp.lt.s32.totalorder %s14, 3
      %p250 = pnand %p248, %p249
      %p251 = pneg %p250
      // Predicated region
      $region45: #{tpu_custom_call.1} parent=5 // pred_check
        _
      $region46: #{tpu_custom_call.1} parent=5 // pred_check_branch
        %253 = sbr.rel (%p250) target = $region48
      $region47: #{tpu_custom_call.1} parent=5 // pred_region
        %s254 = ssub.s32 %s14, 1
        // Predicated region
        $region49: #{tpu_custom_call.1} parent=47 // pred_check
          %p255 = pneg %p61
        $region50: #{tpu_custom_call.1} parent=47 // pred_check_branch
          %257 = sbr.rel (%p255) target = $region52
        $region51: #{tpu_custom_call.1} parent=47 // pred_region
          %259 = dma.done [#allocation3], 9600
        $region52: #{tpu_custom_call.1} parent=47 // pred_fallthru
          _
        %p260 = scmp.lt.s32.totalorder %s19, 1
        %s261 = scalar_select %p260, %s19, 1
        %s262 = smul.addr %s261, 5
        %s263 = smul.addr %s262, 8
        %s264 = scalar_lea.vmem %s0, %s263
        %p265 = pneg %p40
        %p266 = pneg %p37
        %p267 = pneg %p61
        %p268 = pneg %p58
        %p269 = pneg %p82
        %p270 = pneg %p79
        %p271 = pneg %p103
        %p272 = pneg %p100
        %p273 = pneg %p124
        %p274 = pneg %p121
        %p275 = pneg %p145
        %p276 = pneg %p142
        %p277 = pneg %p166
        %p278 = pneg %p163
        %p279 = pneg %p192
        %p280 = pneg %p189
        %p281 = scmp.lt.s32.totalorder %s19, 1
        %s282 = scalar_select %p281, %s19, 1
        %s283 = smul.addr %s282, 8
        %s284 = scalar_lea.vmem %s7, %s283
        %p285 = scmp.lt.s32.totalorder %s19, 1
        %s286 = scalar_select %p285, %s19, 1
        %s287 = smul.addr %s286, 5
        %s288 = smul.addr %s287, 8
        %s289 = scalar_lea.vmem %s0, %s288
        %p290 = scmp.lt.s32.totalorder %s19, 1
        %s291 = scalar_select %p290, %s19, 1
        %s292 = smul.addr %s291, 8
        %s293 = scalar_lea.vmem %s7, %s292
        %v294 = vld [vmem:[%s289] sm:$0xff]
        %v295 = vld [vmem:[%s289 + $0x8] sm:$0xff]
        %v296 = vld [vmem:[%s289 + $0x10] sm:$0xff]
        %v297 = vld [vmem:[%s289 + $0x18] sm:$0xff]
        %v298 = vld [vmem:[%s289 + $0x20] sm:$0xff]
        %v299 = vld [vmem:[#allocation2] sm:$0xff]
        %v300 = vld [vmem:[#allocation2 + $0x8] sm:$0xff]
        %v301 = vld [vmem:[#allocation2 + $0x10] sm:$0xff]
        %v302 = vld [vmem:[#allocation2 + $0x18] sm:$0xff]
        %v303 = vld [vmem:[#allocation2 + $0x20] sm:$0xff]
        %v304 = vld [vmem:[#allocation2 + $0x28] sm:$0xff]
        %v305 = vld [vmem:[#allocation2 + $0x30] sm:$0xff]
        %v306 = vld [vmem:[#allocation2 + $0x38] sm:$0xff]
        %v307 = vld [vmem:[#allocation2 + $0x40] sm:$0xff]
        %v308 = vld [vmem:[#allocation2 + $0x48] sm:$0xff]
        %v309 = vld [vmem:[#allocation2 + $0x50] sm:$0xff]
        %v310 = vld [vmem:[#allocation2 + $0x58] sm:$0xff]
        %v311 = vld [vmem:[#allocation2 + $0x60] sm:$0xff]
        %v312 = vld [vmem:[#allocation2 + $0x68] sm:$0xff]
        %v313 = vld [vmem:[#allocation2 + $0x70] sm:$0xff]
        %v314 = vld [vmem:[#allocation2 + $0x78] sm:$0xff]
        %v315 = vld [vmem:[#allocation2 + $0x80] sm:$0xff]
        %v316 = vld [vmem:[#allocation2 + $0x88] sm:$0xff]
        %v317 = vld [vmem:[#allocation2 + $0x90] sm:$0xff]
        %v318 = vld [vmem:[#allocation2 + $0x98] sm:$0xff]
        %v319 = vld [vmem:[#allocation2 + $0xa0] sm:$0xff]
        %v320 = vld [vmem:[#allocation2 + $0xa8] sm:$0xff]
        %v321 = vld [vmem:[#allocation2 + $0xb0] sm:$0xff]
        %v322 = vld [vmem:[#allocation2 + $0xb8] sm:$0xff]
        %v323 = vld [vmem:[#allocation2 + $0xc0] sm:$0xff]
        %v324 = vld [vmem:[#allocation2 + $0xc8] sm:$0xff]
        %v325 = vld [vmem:[#allocation2 + $0xd0] sm:$0xff]
        %v326 = vld [vmem:[#allocation2 + $0xd8] sm:$0xff]
        %v327 = vld [vmem:[#allocation2 + $0xe0] sm:$0xff]
        %v328 = vld [vmem:[#allocation2 + $0xe8] sm:$0xff]
        %v329 = vld [vmem:[#allocation2 + $0xf0] sm:$0xff]
        %v330 = vld [vmem:[#allocation2 + $0xf8] sm:$0xff]
        %v331 = vld [vmem:[#allocation2 + $0x100] sm:$0xff]
        %v332 = vld [vmem:[#allocation2 + $0x108] sm:$0xff]
        %v333 = vld [vmem:[#allocation2 + $0x110] sm:$0xff]
        %v334 = vld [vmem:[#allocation2 + $0x118] sm:$0xff]
        %v335 = vld [vmem:[#allocation2 + $0x120] sm:$0xff]
        %v336 = vld [vmem:[#allocation2 + $0x128] sm:$0xff]
        %v337 = vld [vmem:[#allocation2 + $0x130] sm:$0xff]
        %v338 = vld [vmem:[#allocation2 + $0x138] sm:$0xff]
        %v339 = vld [vmem:[#allocation2 + $0x140] sm:$0xff]
        %v340 = vld [vmem:[#allocation2 + $0x148] sm:$0xff]
        %v341 = vld [vmem:[#allocation2 + $0x150] sm:$0xff]
        %v342 = vld [vmem:[#allocation2 + $0x158] sm:$0xff]
        %v343 = vld [vmem:[#allocation2 + $0x160] sm:$0xff]
        %v344 = vld [vmem:[#allocation2 + $0x168] sm:$0xff]
        %v345 = vld [vmem:[#allocation2 + $0x170] sm:$0xff]
        %v346 = vld [vmem:[#allocation2 + $0x178] sm:$0xff]
        %v347 = vld [vmem:[#allocation2 + $0x180] sm:$0xff]
        %v348 = vld [vmem:[#allocation2 + $0x188] sm:$0xff]
        %v349 = vld [vmem:[#allocation2 + $0x190] sm:$0xff]
        %v350 = vld [vmem:[#allocation2 + $0x198] sm:$0xff]
        %v351 = vld [vmem:[#allocation2 + $0x1a0] sm:$0xff]
        %v352 = vld [vmem:[#allocation2 + $0x1a8] sm:$0xff]
        %v353 = vld [vmem:[#allocation2 + $0x1b0] sm:$0xff]
        %v354 = vld [vmem:[#allocation2 + $0x1b8] sm:$0xff]
        %v355 = vld [vmem:[#allocation2 + $0x1c0] sm:$0xff]
        %v356 = vld [vmem:[#allocation2 + $0x1c8] sm:$0xff]
        %v357 = vld [vmem:[#allocation2 + $0x1d0] sm:$0xff]
        %v358 = vld [vmem:[#allocation2 + $0x1d8] sm:$0xff]
        %v359 = vld [vmem:[#allocation2 + $0x1e0] sm:$0xff]
        %v360 = vld [vmem:[#allocation2 + $0x1e8] sm:$0xff]
        %v361 = vld [vmem:[#allocation2 + $0x1f0] sm:$0xff]
        %v362 = vld [vmem:[#allocation2 + $0x1f8] sm:$0xff]
        %v363 = vld [vmem:[#allocation2 + $0x200] sm:$0xff]
        %v364 = vld [vmem:[#allocation2 + $0x208] sm:$0xff]
        %v365 = vld [vmem:[#allocation2 + $0x210] sm:$0xff]
        %v366 = vld [vmem:[#allocation2 + $0x218] sm:$0xff]
        %v367 = vld [vmem:[#allocation2 + $0x220] sm:$0xff]
        %v368 = vld [vmem:[#allocation2 + $0x228] sm:$0xff]
        %v369 = vld [vmem:[#allocation2 + $0x230] sm:$0xff]
        %v370 = vld [vmem:[#allocation2 + $0x238] sm:$0xff]
        %v371 = vld [vmem:[#allocation2 + $0x240] sm:$0xff]
        %v372 = vld [vmem:[#allocation2 + $0x248] sm:$0xff]
        %v373 = vld [vmem:[#allocation2 + $0x250] sm:$0xff]
        %v374 = vld [vmem:[%s2] sm:$0x1]
        %v376 = vperm.slane %v374, 0
        %vm378 = vcmask 719872
        %v380 = vsel %vm378, %v298, 0
        %382 = vmatpush.msra.mxu0 %v314
        %383 = vmatpush.msra.mxu0 %v313
        %384 = vmatpush.msra.mxu0 %v312
        %385 = vmatpush.msra.mxu0 %v311
        %386 = vmatpush.msra.mxu0 %v310
        %387 = vmatpush.msra.mxu0 %v309
        %388 = vmatpush.msra.mxu0 %v308
        %389 = vmatpush.msra.mxu0 %v307
        %390 = vmatpush.msra.mxu0 %v306
        %391 = vmatpush.msra.mxu0 %v305
        %392 = vmatpush.msra.mxu0 %v304
        %393 = vmatpush.msra.mxu0 %v303
        %394 = vmatpush.msra.mxu0 %v302
        %395 = vmatpush.msra.mxu0 %v301
        %396 = vmatpush.msra.mxu0 %v300
        %397 = vmatpush.msra.mxu0 %v299
        %398 = vmatmul.f32.gmra.mxu0 %v294
        %v399 = vpop.f32.mrf.mxu0
        %v400 = vadd.f32 %v376, %v399
        %401 = vdwg.mxu0
        %402 = vmatpush.msra.mxu0 %v330
        %403 = vmatpush.msra.mxu0 %v329
        %404 = vmatpush.msra.mxu0 %v328
        %405 = vmatpush.msra.mxu0 %v327
        %406 = vmatpush.msra.mxu0 %v326
        %407 = vmatpush.msra.mxu0 %v325
        %408 = vmatpush.msra.mxu0 %v324
        %409 = vmatpush.msra.mxu0 %v323
        %410 = vmatpush.msra.mxu0 %v322
        %411 = vmatpush.msra.mxu0 %v321
        %412 = vmatpush.msra.mxu0 %v320
        %413 = vmatpush.msra.mxu0 %v319
        %414 = vmatpush.msra.mxu0 %v318
        %415 = vmatpush.msra.mxu0 %v317
        %416 = vmatpush.msra.mxu0 %v316
        %417 = vmatpush.msra.mxu0 %v315
        %418 = vmatmul.f32.gmra.mxu0 %v295
        %v419 = vpop.f32.mrf.mxu0
        %v420 = vadd.f32 %v400, %v419
        %421 = vdwg.mxu0
        %422 = vmatpush.msra.mxu0 %v346
        %423 = vmatpush.msra.mxu0 %v345
        %424 = vmatpush.msra.mxu0 %v344
        %425 = vmatpush.msra.mxu0 %v343
        %426 = vmatpush.msra.mxu0 %v342
        %427 = vmatpush.msra.mxu0 %v341
        %428 = vmatpush.msra.mxu0 %v340
        %429 = vmatpush.msra.mxu0 %v339
        %430 = vmatpush.msra.mxu0 %v338
        %431 = vmatpush.msra.mxu0 %v337
        %432 = vmatpush.msra.mxu0 %v336
        %433 = vmatpush.msra.mxu0 %v335
        %434 = vmatpush.msra.mxu0 %v334
        %435 = vmatpush.msra.mxu0 %v333
        %436 = vmatpush.msra.mxu0 %v332
        %437 = vmatpush.msra.mxu0 %v331
        %438 = vmatmul.f32.gmra.mxu0 %v296
        %v439 = vpop.f32.mrf.mxu0
        %v440 = vadd.f32 %v420, %v439
        %441 = vdwg.mxu0
        %442 = vmatpush.msra.mxu0 %v362
        %443 = vmatpush.msra.mxu0 %v361
        %444 = vmatpush.msra.mxu0 %v360
        %445 = vmatpush.msra.mxu0 %v359
        %446 = vmatpush.msra.mxu0 %v358
        %447 = vmatpush.msra.mxu0 %v357
        %448 = vmatpush.msra.mxu0 %v356
        %449 = vmatpush.msra.mxu0 %v355
        %450 = vmatpush.msra.mxu0 %v354
        %451 = vmatpush.msra.mxu0 %v353
        %452 = vmatpush.msra.mxu0 %v352
        %453 = vmatpush.msra.mxu0 %v351
        %454 = vmatpush.msra.mxu0 %v350
        %455 = vmatpush.msra.mxu0 %v349
        %456 = vmatpush.msra.mxu0 %v348
        %457 = vmatpush.msra.mxu0 %v347
        %458 = vmatmul.f32.gmra.mxu0 %v297
        %v459 = vpop.f32.mrf.mxu0
        %v460 = vadd.f32 %v440, %v459
        %461 = vdwg.mxu0
        %462 = vmatpush.msra.mxu0 0.0
        %463 = vmatpush.msra.mxu0 0.0
        %464 = vmatpush.msra.mxu0 0.0
        %465 = vmatpush.msra.mxu0 0.0
        %466 = vmatpush.msra.mxu0 0.0
        %467 = vmatpush.msra.mxu0 %v373
        %468 = vmatpush.msra.mxu0 %v372
        %469 = vmatpush.msra.mxu0 %v371
        %470 = vmatpush.msra.mxu0 %v370
        %471 = vmatpush.msra.mxu0 %v369
        %472 = vmatpush.msra.mxu0 %v368
        %473 = vmatpush.msra.mxu0 %v367
        %474 = vmatpush.msra.mxu0 %v366
        %475 = vmatpush.msra.mxu0 %v365
        %476 = vmatpush.msra.mxu0 %v364
        %477 = vmatpush.msra.mxu0 %v363
        %478 = vmatmul.f32.gmra.mxu0 %v380
        %v479 = vpop.f32.mrf.mxu0
        %v480 = vadd.f32 %v460, %v479
        %481 = vdwg.mxu0
        %v482 = vmax.f32 %v480, 0.0
        %v483 = vld [vmem:[%s3] sm:$0xff]
        %v484 = vld [vmem:[%s3 + $0x8] sm:$0xff]
        %v485 = vld [vmem:[%s3 + $0x10] sm:$0xff]
        %v486 = vld [vmem:[%s3 + $0x18] sm:$0xff]
        %v487 = vld [vmem:[%s3 + $0x20] sm:$0xff]
        %v488 = vld [vmem:[%s3 + $0x28] sm:$0xff]
        %v489 = vld [vmem:[%s3 + $0x30] sm:$0xff]
        %v490 = vld [vmem:[%s3 + $0x38] sm:$0xff]
        %v491 = vld [vmem:[%s3 + $0x40] sm:$0xff]
        %v492 = vld [vmem:[%s3 + $0x48] sm:$0xff]
        %v493 = vld [vmem:[%s3 + $0x50] sm:$0xff]
        %v494 = vld [vmem:[%s3 + $0x58] sm:$0xff]
        %v495 = vld [vmem:[%s3 + $0x60] sm:$0xff]
        %v496 = vld [vmem:[%s3 + $0x68] sm:$0xff]
        %v497 = vld [vmem:[%s3 + $0x70] sm:$0xff]
        %v498 = vld [vmem:[%s3 + $0x78] sm:$0xff]
        %v499 = vld [vmem:[%s4] sm:$0x1]
        %v501 = vperm.slane %v499, 0
        %503 = vmatpush.msra.mxu0 %v498
        %504 = vmatpush.msra.mxu0 %v497
        %505 = vmatpush.msra.mxu0 %v496
        %506 = vmatpush.msra.mxu0 %v495
        %507 = vmatpush.msra.mxu0 %v494
        %508 = vmatpush.msra.mxu0 %v493
        %509 = vmatpush.msra.mxu0 %v492
        %510 = vmatpush.msra.mxu0 %v491
        %511 = vmatpush.msra.mxu0 %v490
        %512 = vmatpush.msra.mxu0 %v489
        %513 = vmatpush.msra.mxu0 %v488
        %514 = vmatpush.msra.mxu0 %v487
        %515 = vmatpush.msra.mxu0 %v486
        %516 = vmatpush.msra.mxu0 %v485
        %517 = vmatpush.msra.mxu0 %v484
        %518 = vmatpush.msra.mxu0 %v483
        %519 = vmatmul.f32.gmra.mxu0 %v482
        %v520 = vpop.f32.mrf.mxu0
        %v521 = vadd.f32 %v501, %v520
        %522 = vdwg.mxu0
        %v523 = vmax.f32 %v521, 0.0
        %v524 = vld [vmem:[%s5] sm:$0xff]
        %v525 = vld [vmem:[%s5 + $0x8] sm:$0xff]
        %v526 = vld [vmem:[%s5 + $0x10] sm:$0xff]
        %v527 = vld [vmem:[%s5 + $0x18] sm:$0xff]
        %v528 = vld [vmem:[%s5 + $0x20] sm:$0xff]
        %v529 = vld [vmem:[%s5 + $0x28] sm:$0xff]
        %v530 = vld [vmem:[%s5 + $0x30] sm:$0xff]
        %v531 = vld [vmem:[%s5 + $0x38] sm:$0xff]
        %v532 = vld [vmem:[%s6] sm:$0x1]
        %v534 = vperm.slane %v532, 0
        %vm536 = vcmask 523264
        %v538 = vsel %vm536, %v523, 0
        %540 = vmatpush.msra.mxu0 0.0
        %541 = vmatpush.msra.mxu0 0.0
        %542 = vmatpush.msra.mxu0 0.0
        %543 = vmatpush.msra.mxu0 0.0
        %544 = vmatpush.msra.mxu0 0.0
        %545 = vmatpush.msra.mxu0 0.0
        %546 = vmatpush.msra.mxu0 0.0
        %547 = vmatpush.msra.mxu0 0.0
        %548 = vmatpush.msra.mxu0 %v531
        %549 = vmatpush.msra.mxu0 %v530
        %550 = vmatpush.msra.mxu0 %v529
        %551 = vmatpush.msra.mxu0 %v528
        %552 = vmatpush.msra.mxu0 %v527
        %553 = vmatpush.msra.mxu0 %v526
        %554 = vmatpush.msra.mxu0 %v525
        %555 = vmatpush.msra.mxu0 %v524
        %556 = vmatmul.f32.gmra.mxu0 %v538
        %v557 = vpop.f32.mrf.mxu0
        %v558 = vadd.f32 %v534, %v557
        %559 = vdwg.mxu0
        %v560 = vmax.f32 %v558, 0.0
        %vm561 = vcmask 64512
        %562 = vst.msk [vmem:[%s293] sm:$0xff] %vm561, %v560
        %p563 = scmp.lt.s32.totalorder %s19, 1
        %s564 = scalar_select %p563, %s19, 1
        %s565 = smul.addr %s564, 8
        %s566 = scalar_lea.vmem %s7, %s565
        // Predicated region
        $region53: #{tpu_custom_call.1} parent=47 // pred_check
          %p567 = pneg %p189
        $region54: #{tpu_custom_call.1} parent=47 // pred_check_branch
          %569 = sbr.rel (%p567) target = $region56
        $region55: #{tpu_custom_call.1} parent=47 // pred_region
          _
        $region56: #{tpu_custom_call.1} parent=47 // pred_fallthru
          _
      $region48: #{tpu_custom_call.1} parent=5 // pred_fallthru
        _
      %p570 = scmp.le.s32.totalorder 2, %s14
      // Predicated region
      $region57: #{tpu_custom_call.1} parent=5 // pred_check
        %p571 = pneg %p570
      $region58: #{tpu_custom_call.1} parent=5 // pred_check_branch
        %573 = sbr.rel (%p571) target = $region60
      $region59: #{tpu_custom_call.1} parent=5 // pred_region
        %s574 = ssub.s32 %s14, 2
        // Predicated region
        $region61: #{tpu_custom_call.1} parent=59 // pred_check
          %p575 = pneg %p195
        $region62: #{tpu_custom_call.1} parent=59 // pred_check_branch
          %577 = sbr.rel (%p575) target = $region64
        $region63: #{tpu_custom_call.1} parent=59 // pred_region
          %p578 = scmp.lt.s32.totalorder %s20, 1
          %s579 = scalar_select %p578, %s20, 1
          %s580 = smul.addr %s579, 8
          %s581 = scalar_lea.vmem %s7, %s580
        $region64: #{tpu_custom_call.1} parent=59 // pred_fallthru
          _
      $region60: #{tpu_custom_call.1} parent=5 // pred_fallthru
        _
    $region6: #{tpu_custom_call.1} parent=1 // loop_footer
      %s18 = sadd.s32 1, %s14
    $region7: #{tpu_custom_call.1} parent=1 // loop_footer_branch
      %13 = sbr.rel target = $region3
    $region8: #{tpu_custom_call.1} parent=1 // loop_exit
      _
    %582 = vsyncpa [#allocation3], 1
    %s583 = scalar_lea.sflag [#allocation3], 1
    %584 = vsyncpa %s583, 1

</llo_original>
